<compile_context>
chip_gen: v7x
topology: tpu7x:2x2x1
jax: 0.10.0
libtpu: 0.0.40
codegen_flags: <defaults>
</compile_context>

<pallas_src>
import jax
import jax.numpy as jnp
from jax.experimental import pallas as pl
from jax.experimental.pallas import tpu as pltpu


def _round_up(n, m):
    return ((n + m - 1) // m) * m


def fc_env_middle_kernel(x_ref,
                         w1_ref, b1_ref,
                         w2_ref, b2_ref,
                         w3_ref, b3_ref,
                         w4_ref, b4_ref,
                         o_ref):
    cd = w1_ref.dtype                       # MXU compute dtype (bf16)
    x = x_ref[...].astype(cd)               # in-kernel f32 -> bf16 cast

    # fc1 + relu
    h = jnp.dot(x, w1_ref[...], preferred_element_type=jnp.float32)
    h = jnp.maximum(h + b1_ref[...], 0.0)
    # fc2 + relu
    h = jnp.dot(h.astype(cd), w2_ref[...], preferred_element_type=jnp.float32)
    h = jnp.maximum(h + b2_ref[...], 0.0)
    # fc3 + relu
    h = jnp.dot(h.astype(cd), w3_ref[...], preferred_element_type=jnp.float32)
    h = jnp.maximum(h + b3_ref[...], 0.0)
    # regress (H -> 1 per packed segment): block-diagonal f32 matrix, N = pack.
    out = jnp.dot(h, w4_ref[...], preferred_element_type=jnp.float32) + b4_ref[...]
    o_ref[...] = out.astype(o_ref.dtype)


def fc_env_middle_forward(x, params, *, block_b=4096, pack_lanes=128,
                          compute_dtype=jnp.bfloat16):
    """x: [B, num_features] float32.  Returns [B, 1] float32.

    pack_lanes: lane width to pack small feature dims into (128 everywhere;
    try 256 on v6e/v7x per the review).  block_b: batch tile in unpacked rows
    (sweep 2048-8192 for production batches)."""
    B, F = x.shape
    H = params["w1"].shape[1]

    # ---- choose the lane-packing factor p (rows packed per 128/256 lanes) ----
    p = max(1, pack_lanes // max(F, H))
    while p > 1 and B % p != 0:     # packing needs B % p == 0; shrink otherwise
        p -= 1

    f32 = jnp.float32
    if p > 1:
        eye = jnp.eye(p, dtype=f32)
        w1 = jnp.kron(eye, params["w1"]).astype(compute_dtype)
        w2 = jnp.kron(eye, params["w2"]).astype(compute_dtype)
        w3 = jnp.kron(eye, params["w3"]).astype(compute_dtype)
        w4 = jnp.kron(eye, params["w4"].astype(f32))          # (p*H, p), f32
        b1 = jnp.tile(params["b1"].astype(f32), (1, p))
        b2 = jnp.tile(params["b2"].astype(f32), (1, p))
        b3 = jnp.tile(params["b3"].astype(f32), (1, p))
        b4 = jnp.tile(params["b4"].reshape(1, 1).astype(f32), (1, p))
        xk = x.reshape(B // p, p * F)                         # free metadata reshape
    else:
        w1 = params["w1"].astype(compute_dtype)
        w2 = params["w2"].astype(compute_dtype)
        w3 = params["w3"].astype(compute_dtype)
        w4 = params["w4"].astype(f32)                          # (H, 1)
        b1 = params["b1"].astype(f32)
        b2 = params["b2"].astype(f32)
        b3 = params["b3"].astype(f32)
        b4 = params["b4"].reshape(1, 1).astype(f32)
        xk = x

    rows, feat = xk.shape

    # ---- batch tile (packed rows): multiple of 16 sublanes, big by default,
    # but capped so the grid keeps >= ~4 steps (feeds both v7x TensorCores). ----
    tb = min(_round_up(max(block_b // p, 1), 16),
             _round_up(pl.cdiv(rows, 4), 16))
    tb = max(16, min(tb, _round_up(rows, 16)))
    grid = (pl.cdiv(rows, tb),)

    weights = (w1, b1, w2, b2, w3, b3, w4, b4)
    # Full-shape blocks with a constant index_map: weights stay resident in
    # VMEM across the whole grid (no re-fetch after step 0).
    w_specs = [pl.BlockSpec(w.shape, lambda i: (0, 0)) for w in weights]

    out = pl.pallas_call(
        fc_env_middle_kernel,
        out_shape=jax.ShapeDtypeStruct((rows, p), jnp.float32),
        grid_spec=pltpu.PrefetchScalarGridSpec(
            num_scalar_prefetch=0,
            grid=grid,
            in_specs=[pl.BlockSpec((tb, feat), lambda i: (i, 0))] + w_specs,
            out_specs=pl.BlockSpec((tb, p), lambda i: (i, 0)),
        ),
        compiler_params=pltpu.CompilerParams(
            dimension_semantics=("parallel",)),
    )(xk, *weights)

    return out.reshape(B, 1)   # free: (B/p, p) is row-major batch order


def init_params(key, num_features, hidden_dim):
    """nn.Linear-style init (uniform +-1/sqrt(fan_in)); weights stored
    pre-transposed as [in, out], biases as [1, out]."""
    keys = jax.random.split(key, 8)

    def linear(kw, kb, fan_in, fan_out):
        bound = 1.0 / jnp.sqrt(jnp.float32(fan_in))
        w = jax.random.uniform(kw, (fan_in, fan_out), jnp.float32, -bound, bound)
        b = jax.random.uniform(kb, (1, fan_out), jnp.float32, -bound, bound)
        return w, b

    w1, b1 = linear(keys[0], keys[1], num_features, hidden_dim)
    w2, b2 = linear(keys[2], keys[3], hidden_dim, hidden_dim)
    w3, b3 = linear(keys[4], keys[5], hidden_dim, hidden_dim)
    w4, b4 = linear(keys[6], keys[7], hidden_dim, 1)
    return {"w1": w1, "b1": b1, "w2": w2, "b2": b2,
            "w3": w3, "b3": b3, "w4": w4, "b4": b4}


def reference_forward(x, p, compute_dtype=jnp.bfloat16):
    """Same mixed-precision policy as the kernel (bf16 MXU operands, f32 accum)."""
    cd = compute_dtype
    h = jnp.maximum(jnp.dot(x.astype(cd), p["w1"].astype(cd),
                            preferred_element_type=jnp.float32) + p["b1"], 0.0)
    h = jnp.maximum(jnp.dot(h.astype(cd), p["w2"].astype(cd),
                            preferred_element_type=jnp.float32) + p["b2"], 0.0)
    h = jnp.maximum(jnp.dot(h.astype(cd), p["w3"].astype(cd),
                            preferred_element_type=jnp.float32) + p["b3"], 0.0)
    return h @ p["w4"] + p["b4"].reshape(1, 1)


def reference_forward_f32(x, p):
    h = jnp.maximum(x @ p["w1"] + p["b1"], 0.0)
    h = jnp.maximum(h @ p["w2"] + p["b2"], 0.0)
    h = jnp.maximum(h @ p["w3"] + p["b3"], 0.0)
    return h @ p["w4"] + p["b4"].reshape(1, 1)


if __name__ == "__main__":
    # B=200 with block_b=64 exercises the lane packing (p=4 -> 50 packed rows),
    # a multi-step parallel grid (4 steps of 16 packed rows) and the ragged,
    # masked last block (only 2 of 16 rows valid).
    B, NUM_FEATURES, HIDDEN = 200, 32, 32

    key = jax.random.PRNGKey(0)
    kx, kp = jax.random.split(key)
    x = jax.random.normal(kx, (B, NUM_FEATURES), jnp.float32)
    params = init_params(kp, NUM_FEATURES, HIDDEN)

    out = fc_env_middle_forward(x, params, block_b=64)
    out = jax.block_until_ready(out)

    ref = reference_forward(x, params)        # same mixed-precision policy
    ref32 = reference_forward_f32(x, params)  # pure f32 semantics

    assert out.shape == (B, 1)
    assert jnp.allclose(out, ref, atol=5e-3, rtol=5e-3)
    assert jnp.allclose(out, ref32, atol=5e-2, rtol=5e-2)

    print("KERNEL_OK")
</pallas_src>

<mosaic_0001>
module attributes {stable_mosaic.version = 11 : i64} {
  func.func @fc_env_middle_kernel(%arg0: i32, %arg1: memref<16x128xf32, #tpu.memory_space<vmem>>, %arg2: memref<128x128xbf16, #tpu.memory_space<vmem>>, %arg3: memref<1x128xf32, #tpu.memory_space<vmem>>, %arg4: memref<128x128xbf16, #tpu.memory_space<vmem>>, %arg5: memref<1x128xf32, #tpu.memory_space<vmem>>, %arg6: memref<128x128xbf16, #tpu.memory_space<vmem>>, %arg7: memref<1x128xf32, #tpu.memory_space<vmem>>, %arg8: memref<128x4xf32, #tpu.memory_space<vmem>>, %arg9: memref<1x4xf32, #tpu.memory_space<vmem>>, %arg10: memref<16x4xf32, #tpu.memory_space<vmem>>) attributes {dimension_semantics = [#tpu.dimension_semantics<parallel>], iteration_bounds = array<i64: 4>, scalar_prefetch = 0 : i64, scratch_operands = 0 : i64, tpu.core_type = #tpu.core_type<tc>, window_params = [{transform_indices = @transform_0, window_bounds = array<i64: 16, 128>}, {pipeline_mode = #tpu.pipeline_mode<synchronous>, transform_indices = @transform_1, window_bounds = array<i64: 128, 128>}, {pipeline_mode = #tpu.pipeline_mode<synchronous>, transform_indices = @transform_2, window_bounds = array<i64: 1, 128>}, {pipeline_mode = #tpu.pipeline_mode<synchronous>, transform_indices = @transform_3, window_bounds = array<i64: 128, 128>}, {pipeline_mode = #tpu.pipeline_mode<synchronous>, transform_indices = @transform_4, window_bounds = array<i64: 1, 128>}, {pipeline_mode = #tpu.pipeline_mode<synchronous>, transform_indices = @transform_5, window_bounds = array<i64: 128, 128>}, {pipeline_mode = #tpu.pipeline_mode<synchronous>, transform_indices = @transform_6, window_bounds = array<i64: 1, 128>}, {pipeline_mode = #tpu.pipeline_mode<synchronous>, transform_indices = @transform_7, window_bounds = array<i64: 128, 4>}, {pipeline_mode = #tpu.pipeline_mode<synchronous>, transform_indices = @transform_8, window_bounds = array<i64: 1, 4>}, {transform_indices = @transform_9, window_bounds = array<i64: 16, 4>}]} {
    %c0 = arith.constant 0 : index
    %c0_0 = arith.constant 0 : index
    %0 = vector.load %arg1[%c0, %c0_0] : memref<16x128xf32, #tpu.memory_space<vmem>>, vector<16x128xf32>
    %1 = arith.truncf %0 : vector<16x128xf32> to vector<16x128xbf16>
    %c0_1 = arith.constant 0 : index
    %c0_2 = arith.constant 0 : index
    %2 = vector.load %arg2[%c0_1, %c0_2] : memref<128x128xbf16, #tpu.memory_space<vmem>>, vector<128x128xbf16>
    %cst = arith.constant dense<0.000000e+00> : vector<16x128xf32>
    %3 = tpu.matmul %1, %2, %cst {dimension_numbers = #tpu.dot_dimension_numbers<[1], [0], [0], [1], [0, 0, 1, 1], [], []>} : vector<16x128xbf16>, vector<128x128xbf16>, vector<16x128xf32> -> vector<16x128xf32>
    %c0_3 = arith.constant 0 : index
    %c0_4 = arith.constant 0 : index
    %4 = vector.load %arg3[%c0_3, %c0_4] : memref<1x128xf32, #tpu.memory_space<vmem>>, vector<1x128xf32>
    %5 = vector.broadcast %4 : vector<1x128xf32> to vector<16x128xf32>
    %6 = arith.addf %3, %5 : vector<16x128xf32>
    %cst_5 = arith.constant 0.000000e+00 : f32
    %7 = vector.broadcast %cst_5 : f32 to vector<16x128xf32>
    %8 = arith.maximumf %6, %7 : vector<16x128xf32>
    %9 = arith.truncf %8 : vector<16x128xf32> to vector<16x128xbf16>
    %c0_6 = arith.constant 0 : index
    %c0_7 = arith.constant 0 : index
    %10 = vector.load %arg4[%c0_6, %c0_7] : memref<128x128xbf16, #tpu.memory_space<vmem>>, vector<128x128xbf16>
    %cst_8 = arith.constant dense<0.000000e+00> : vector<16x128xf32>
    %11 = tpu.matmul %9, %10, %cst_8 {dimension_numbers = #tpu.dot_dimension_numbers<[1], [0], [0], [1], [0, 0, 1, 1], [], []>} : vector<16x128xbf16>, vector<128x128xbf16>, vector<16x128xf32> -> vector<16x128xf32>
    %c0_9 = arith.constant 0 : index
    %c0_10 = arith.constant 0 : index
    %12 = vector.load %arg5[%c0_9, %c0_10] : memref<1x128xf32, #tpu.memory_space<vmem>>, vector<1x128xf32>
    %13 = vector.broadcast %12 : vector<1x128xf32> to vector<16x128xf32>
    %14 = arith.addf %11, %13 : vector<16x128xf32>
    %cst_11 = arith.constant 0.000000e+00 : f32
    %15 = vector.broadcast %cst_11 : f32 to vector<16x128xf32>
    %16 = arith.maximumf %14, %15 : vector<16x128xf32>
    %17 = arith.truncf %16 : vector<16x128xf32> to vector<16x128xbf16>
    %c0_12 = arith.constant 0 : index
    %c0_13 = arith.constant 0 : index
    %18 = vector.load %arg6[%c0_12, %c0_13] : memref<128x128xbf16, #tpu.memory_space<vmem>>, vector<128x128xbf16>
    %cst_14 = arith.constant dense<0.000000e+00> : vector<16x128xf32>
    %19 = tpu.matmul %17, %18, %cst_14 {dimension_numbers = #tpu.dot_dimension_numbers<[1], [0], [0], [1], [0, 0, 1, 1], [], []>} : vector<16x128xbf16>, vector<128x128xbf16>, vector<16x128xf32> -> vector<16x128xf32>
    %c0_15 = arith.constant 0 : index
    %c0_16 = arith.constant 0 : index
    %20 = vector.load %arg7[%c0_15, %c0_16] : memref<1x128xf32, #tpu.memory_space<vmem>>, vector<1x128xf32>
    %21 = vector.broadcast %20 : vector<1x128xf32> to vector<16x128xf32>
    %22 = arith.addf %19, %21 : vector<16x128xf32>
    %cst_17 = arith.constant 0.000000e+00 : f32
    %23 = vector.broadcast %cst_17 : f32 to vector<16x128xf32>
    %24 = arith.maximumf %22, %23 : vector<16x128xf32>
    %c0_18 = arith.constant 0 : index
    %c0_19 = arith.constant 0 : index
    %25 = vector.load %arg8[%c0_18, %c0_19] : memref<128x4xf32, #tpu.memory_space<vmem>>, vector<128x4xf32>
    %cst_20 = arith.constant dense<0.000000e+00> : vector<16x4xf32>
    %26 = tpu.matmul %24, %25, %cst_20 {dimension_numbers = #tpu.dot_dimension_numbers<[1], [0], [0], [1], [0, 0, 1, 1], [], []>} : vector<16x128xf32>, vector<128x4xf32>, vector<16x4xf32> -> vector<16x4xf32>
    %c0_21 = arith.constant 0 : index
    %c0_22 = arith.constant 0 : index
    %27 = vector.load %arg9[%c0_21, %c0_22] : memref<1x4xf32, #tpu.memory_space<vmem>>, vector<1x4xf32>
    %28 = vector.broadcast %27 : vector<1x4xf32> to vector<16x4xf32>
    %29 = arith.addf %26, %28 : vector<16x4xf32>
    %c0_23 = arith.constant 0 : index
    %c0_24 = arith.constant 0 : index
    %30 = vector.load %arg10[%c0_23, %c0_24] : memref<16x4xf32, #tpu.memory_space<vmem>>, vector<16x4xf32>
    tpu.vector_store %arg10[%c0_23, %c0_24], %29 {strides = array<i32>} : memref<16x4xf32, #tpu.memory_space<vmem>>, vector<16x4xf32>,
    return
  }
  func.func @transform_0(%arg0: i32) -> (i32, i32) {
    %c0_i32 = arith.constant 0 : i32
    %c0_i32_0 = arith.constant 0 : i32
    return %arg0, %c0_i32 : i32, i32
  }
  func.func @transform_1(%arg0: i32) -> (i32, i32) {
    %c0_i32 = arith.constant 0 : i32
    %c0_i32_0 = arith.constant 0 : i32
    %c0_i32_1 = arith.constant 0 : i32
    return %c0_i32, %c0_i32_0 : i32, i32
  }
  func.func @transform_2(%arg0: i32) -> (i32, i32) {
    %c0_i32 = arith.constant 0 : i32
    %c0_i32_0 = arith.constant 0 : i32
    %c0_i32_1 = arith.constant 0 : i32
    return %c0_i32, %c0_i32_0 : i32, i32
  }
  func.func @transform_3(%arg0: i32) -> (i32, i32) {
    %c0_i32 = arith.constant 0 : i32
    %c0_i32_0 = arith.constant 0 : i32
    %c0_i32_1 = arith.constant 0 : i32
    return %c0_i32, %c0_i32_0 : i32, i32
  }
  func.func @transform_4(%arg0: i32) -> (i32, i32) {
    %c0_i32 = arith.constant 0 : i32
    %c0_i32_0 = arith.constant 0 : i32
    %c0_i32_1 = arith.constant 0 : i32
    return %c0_i32, %c0_i32_0 : i32, i32
  }
  func.func @transform_5(%arg0: i32) -> (i32, i32) {
    %c0_i32 = arith.constant 0 : i32
    %c0_i32_0 = arith.constant 0 : i32
    %c0_i32_1 = arith.constant 0 : i32
    return %c0_i32, %c0_i32_0 : i32, i32
  }
  func.func @transform_6(%arg0: i32) -> (i32, i32) {
    %c0_i32 = arith.constant 0 : i32
    %c0_i32_0 = arith.constant 0 : i32
    %c0_i32_1 = arith.constant 0 : i32
    return %c0_i32, %c0_i32_0 : i32, i32
  }
  func.func @transform_7(%arg0: i32) -> (i32, i32) {
    %c0_i32 = arith.constant 0 : i32
    %c0_i32_0 = arith.constant 0 : i32
    %c0_i32_1 = arith.constant 0 : i32
    return %c0_i32, %c0_i32_0 : i32, i32
  }
  func.func @transform_8(%arg0: i32) -> (i32, i32) {
    %c0_i32 = arith.constant 0 : i32
    %c0_i32_0 = arith.constant 0 : i32
    %c0_i32_1 = arith.constant 0 : i32
    return %c0_i32, %c0_i32_0 : i32, i32
  }
  func.func @transform_9(%arg0: i32) -> (i32, i32) {
    %c0_i32 = arith.constant 0 : i32
    %c0_i32_0 = arith.constant 0 : i32
    return %arg0, %c0_i32 : i32, i32
  }
}

</mosaic_0001>

<llo_original>
// kernel: tpu_custom_call.1
$region0: #{tpu_custom_call.1}
  #allocation0 [shape = 'u32[]', space=smem, size = 0x4, offset = 0x4, fixed_abs, tag = 'smem constant byte address 0x4 - core index']
  #allocation1 [shape = 'u32[144,128]{1,0:T(1,128)}', space=vmem, size = 0x12000, scoped, tag = 'internal scratch']
  %s0 = inlined_call_operand.hbm [shape: f32[50,128], index: 0, kind: input, shape index: {}]
  %s1 = inlined_call_operand.vmem [shape: bf16[128,128], index: 1, kind: input, shape index: {}]
  %s2 = inlined_call_operand.vmem [shape: f32[1,128], index: 2, kind: input, shape index: {}]
  %s3 = inlined_call_operand.vmem [shape: bf16[128,128], index: 3, kind: input, shape index: {}]
  %s4 = inlined_call_operand.vmem [shape: f32[1,128], index: 4, kind: input, shape index: {}]
  %s5 = inlined_call_operand.hbm [shape: bf16[128,128], index: 5, kind: input, shape index: {}]
  %s6 = inlined_call_operand.vmem [shape: f32[1,128], index: 6, kind: input, shape index: {}]
  %s7 = inlined_call_operand.vmem [shape: f32[128,4], index: 7, kind: input, shape index: {}]
  %s8 = inlined_call_operand.vmem [shape: f32[1,4], index: 8, kind: input, shape index: {}]
  %s9 = inlined_call_operand.vmem [shape: f32[50,4], index: 9, kind: output, shape index: {}]
  %s10 = sld [smem:[#allocation0]]
  $region125: #{tpu_custom_call.1} parent=0
    _
  %s12 = ssub.s32 1, %s10
  %s13 = scalar_select 0, %s12, %s10
  $region1: #{tpu_custom_call.1} parent=0
    #allocation2 [shape = 'u8[16384]{0}', space=vmem, size = 0x4000, scoped, tag = 'input window, operand 0']
    #allocation3 [shape = 's32[2]{0}', space=sflag, size = 0x8, scoped, tag = 'scoped memory for tpu_custom_call.1']
    #allocation4 [shape = 'u8[32768]{0}', space=vmem, size = 0x8000, scoped, tag = 'input window, operand 5, single buffered']
    #allocation5 [shape = 's32[1]{0}', space=sflag, size = 0x4, scoped, tag = 'scoped memory for tpu_custom_call.1']
    #allocation6 [shape = 'u8[16384]{0}', space=vmem, size = 0x4000, scoped, tag = 'output window, operand 0']
    %14 = vsyncpa [#allocation3], 0
    %s15 = scalar_lea.sflag [#allocation3], 1
    %16 = vsyncpa %s15, 0
    %17 = vsyncpa [#allocation5], 0
    loop: start=0, step=1, limit=6
    $region2: #{tpu_custom_call.1} parent=1 // loop_pre_header
      _
    $region3: #{tpu_custom_call.1} parent=1 // loop_header
      %s19 = sphi 0, %s23
      %p20 = scmp.ge.s32.totalorder %s19, 6
      %s29 = sphi 0, %s31
      %s32 = sphi 0, %s29
      %s33 = sphi 0, %s32
      %s49 = sphi 0, %s33
      %s53 = sphi 0, %s53
      %s55 = sphi 0, %s53
      %s56 = sphi 0, %s55
      %s70 = sphi 0, %s56
      %s74 = sphi 0, %s74
      %s76 = sphi 0, %s74
      %s77 = sphi 0, %s76
      %s91 = sphi 0, %s77
      %s95 = sphi 0, %s95
      %s97 = sphi 0, %s95
      %s98 = sphi 0, %s97
      %s112 = sphi 0, %s98
      %s116 = sphi 0, %s116
      %s118 = sphi 0, %s116
      %s119 = sphi 0, %s118
      %s133 = sphi 0, %s119
      %s137 = sphi 0, %s137
      %s139 = sphi 0, %s137
      %s140 = sphi 0, %s139
      %s154 = sphi 0, %s140
      %s158 = sphi 0, %s158
      %s160 = sphi 0, %s158
      %s161 = sphi 0, %s160
      %s175 = sphi 0, %s161
      %s179 = sphi 0, %s179
      %s181 = sphi 0, %s179
      %s182 = sphi 0, %s181
      %s196 = sphi 0, %s182
      %s200 = sphi 0, %s200
      %s202 = sphi 0, %s200
      %s203 = sphi 0, %s202
      %s217 = sphi 0, %s203
      %s223 = sphi 0, %s225
      %s226 = sphi 0, %s223
      %s227 = sphi 0, %s226
      %s243 = sphi 0, %s227
    $region4: #{tpu_custom_call.1} parent=1 // loop_header_branch
      %22 = sbr.rel (%p20) target = $region8
    $region5: #{tpu_custom_call.1} parent=1 // loop_body
      %s24 = ssub.s32 %s19, 1
      %s25 = ssub.s32 %s19, 2
      %s26 = sadd.s32 %s19, 1
      %s27 = ssub.s32 %s19, %s26
      %p28 = scmp.eq.s32.totalorder %s27, 0
      %s30 = sadd.s32 %s29, 1
      %s31 = scalar_select %p28, %s29, %s30
      %p34 = pneg %p28
      %p35 = scmp.eq.s32.totalorder %s19, 3
      %p36 = por %p34, %p35
      %p37 = scmp.ne.s32.totalorder %s29, %s32
      %p38 = scmp.eq.s32.totalorder %s19, 0
      %p39 = por %p37, %p38
      %p40 = scmp.ne.s32.totalorder %s29, %s32
      %p41 = scmp.eq.s32.totalorder %s24, 3
      %p42 = por %p40, %p41
      %p43 = scmp.ne.s32.totalorder %s32, %s33
      %p44 = scmp.eq.s32.totalorder %s24, 0
      %p45 = por %p43, %p44
      %p46 = scmp.ne.s32.totalorder %s32, %s33
      %p47 = scmp.eq.s32.totalorder %s25, 3
      %p48 = por %p46, %p47
      %p50 = scmp.ne.s32.totalorder %s33, %s49
      %p51 = scmp.eq.s32.totalorder %s25, 0
      %p52 = por %p50, %p51
      %s54 = sadd.s32 %s53, 1
      %p57 = scmp.eq.s32.totalorder %s19, 3
      %p58 = scmp.ne.s32.totalorder %s53, %s55
      %p59 = scmp.eq.s32.totalorder %s19, 0
      %p60 = por %p58, %p59
      %p61 = scmp.ne.s32.totalorder %s53, %s55
      %p62 = scmp.eq.s32.totalorder %s24, 3
      %p63 = por %p61, %p62
      %p64 = scmp.ne.s32.totalorder %s55, %s56
      %p65 = scmp.eq.s32.totalorder %s24, 0
      %p66 = por %p64, %p65
      %p67 = scmp.ne.s32.totalorder %s55, %s56
      %p68 = scmp.eq.s32.totalorder %s25, 3
      %p69 = por %p67, %p68
      %p71 = scmp.ne.s32.totalorder %s56, %s70
      %p72 = scmp.eq.s32.totalorder %s25, 0
      %p73 = por %p71, %p72
      %s75 = sadd.s32 %s74, 1
      %p78 = scmp.eq.s32.totalorder %s19, 3
      %p79 = scmp.ne.s32.totalorder %s74, %s76
      %p80 = scmp.eq.s32.totalorder %s19, 0
      %p81 = por %p79, %p80
      %p82 = scmp.ne.s32.totalorder %s74, %s76
      %p83 = scmp.eq.s32.totalorder %s24, 3
      %p84 = por %p82, %p83
      %p85 = scmp.ne.s32.totalorder %s76, %s77
      %p86 = scmp.eq.s32.totalorder %s24, 0
      %p87 = por %p85, %p86
      %p88 = scmp.ne.s32.totalorder %s76, %s77
      %p89 = scmp.eq.s32.totalorder %s25, 3
      %p90 = por %p88, %p89
      %p92 = scmp.ne.s32.totalorder %s77, %s91
      %p93 = scmp.eq.s32.totalorder %s25, 0
      %p94 = por %p92, %p93
      %s96 = sadd.s32 %s95, 1
      %p99 = scmp.eq.s32.totalorder %s19, 3
      %p100 = scmp.ne.s32.totalorder %s95, %s97
      %p101 = scmp.eq.s32.totalorder %s19, 0
      %p102 = por %p100, %p101
      %p103 = scmp.ne.s32.totalorder %s95, %s97
      %p104 = scmp.eq.s32.totalorder %s24, 3
      %p105 = por %p103, %p104
      %p106 = scmp.ne.s32.totalorder %s97, %s98
      %p107 = scmp.eq.s32.totalorder %s24, 0
      %p108 = por %p106, %p107
      %p109 = scmp.ne.s32.totalorder %s97, %s98
      %p110 = scmp.eq.s32.totalorder %s25, 3
      %p111 = por %p109, %p110
      %p113 = scmp.ne.s32.totalorder %s98, %s112
      %p114 = scmp.eq.s32.totalorder %s25, 0
      %p115 = por %p113, %p114
      %s117 = sadd.s32 %s116, 1
      %p120 = scmp.eq.s32.totalorder %s19, 3
      %p121 = scmp.ne.s32.totalorder %s116, %s118
      %p122 = scmp.eq.s32.totalorder %s19, 0
      %p123 = por %p121, %p122
      %p124 = scmp.ne.s32.totalorder %s116, %s118
      %p125 = scmp.eq.s32.totalorder %s24, 3
      %p126 = por %p124, %p125
      %p127 = scmp.ne.s32.totalorder %s118, %s119
      %p128 = scmp.eq.s32.totalorder %s24, 0
      %p129 = por %p127, %p128
      %p130 = scmp.ne.s32.totalorder %s118, %s119
      %p131 = scmp.eq.s32.totalorder %s25, 3
      %p132 = por %p130, %p131
      %p134 = scmp.ne.s32.totalorder %s119, %s133
      %p135 = scmp.eq.s32.totalorder %s25, 0
      %p136 = por %p134, %p135
      %s138 = sadd.s32 %s137, 1
      %p141 = scmp.eq.s32.totalorder %s19, 3
      %p142 = scmp.ne.s32.totalorder %s137, %s139
      %p143 = scmp.eq.s32.totalorder %s19, 0
      %p144 = por %p142, %p143
      %p145 = scmp.ne.s32.totalorder %s137, %s139
      %p146 = scmp.eq.s32.totalorder %s24, 3
      %p147 = por %p145, %p146
      %p148 = scmp.ne.s32.totalorder %s139, %s140
      %p149 = scmp.eq.s32.totalorder %s24, 0
      %p150 = por %p148, %p149
      %p151 = scmp.ne.s32.totalorder %s139, %s140
      %p152 = scmp.eq.s32.totalorder %s25, 3
      %p153 = por %p151, %p152
      %p155 = scmp.ne.s32.totalorder %s140, %s154
      %p156 = scmp.eq.s32.totalorder %s25, 0
      %p157 = por %p155, %p156
      %s159 = sadd.s32 %s158, 1
      %p162 = scmp.eq.s32.totalorder %s19, 3
      %p163 = scmp.ne.s32.totalorder %s158, %s160
      %p164 = scmp.eq.s32.totalorder %s19, 0
      %p165 = por %p163, %p164
      %p166 = scmp.ne.s32.totalorder %s158, %s160
      %p167 = scmp.eq.s32.totalorder %s24, 3
      %p168 = por %p166, %p167
      %p169 = scmp.ne.s32.totalorder %s160, %s161
      %p170 = scmp.eq.s32.totalorder %s24, 0
      %p171 = por %p169, %p170
      %p172 = scmp.ne.s32.totalorder %s160, %s161
      %p173 = scmp.eq.s32.totalorder %s25, 3
      %p174 = por %p172, %p173
      %p176 = scmp.ne.s32.totalorder %s161, %s175
      %p177 = scmp.eq.s32.totalorder %s25, 0
      %p178 = por %p176, %p177
      %s180 = sadd.s32 %s179, 1
      %p183 = scmp.eq.s32.totalorder %s19, 3
      %p184 = scmp.ne.s32.totalorder %s179, %s181
      %p185 = scmp.eq.s32.totalorder %s19, 0
      %p186 = por %p184, %p185
      %p187 = scmp.ne.s32.totalorder %s179, %s181
      %p188 = scmp.eq.s32.totalorder %s24, 3
      %p189 = por %p187, %p188
      %p190 = scmp.ne.s32.totalorder %s181, %s182
      %p191 = scmp.eq.s32.totalorder %s24, 0
      %p192 = por %p190, %p191
      %p193 = scmp.ne.s32.totalorder %s181, %s182
      %p194 = scmp.eq.s32.totalorder %s25, 3
      %p195 = por %p193, %p194
      %p197 = scmp.ne.s32.totalorder %s182, %s196
      %p198 = scmp.eq.s32.totalorder %s25, 0
      %p199 = por %p197, %p198
      %s201 = sadd.s32 %s200, 1
      %p204 = scmp.eq.s32.totalorder %s19, 3
      %p205 = scmp.ne.s32.totalorder %s200, %s202
      %p206 = scmp.eq.s32.totalorder %s19, 0
      %p207 = por %p205, %p206
      %p208 = scmp.ne.s32.totalorder %s200, %s202
      %p209 = scmp.eq.s32.totalorder %s24, 3
      %p210 = por %p208, %p209
      %p211 = scmp.ne.s32.totalorder %s202, %s203
      %p212 = scmp.eq.s32.totalorder %s24, 0
      %p213 = por %p211, %p212
      %p214 = scmp.ne.s32.totalorder %s202, %s203
      %p215 = scmp.eq.s32.totalorder %s25, 3
      %p216 = por %p214, %p215
      %p218 = scmp.ne.s32.totalorder %s203, %s217
      %p219 = scmp.eq.s32.totalorder %s25, 0
      %p220 = por %p218, %p219
      %s221 = ssub.s32 %s19, %s26
      %p222 = scmp.eq.s32.totalorder %s221, 0
      %s224 = sadd.s32 %s223, 1
      %s225 = scalar_select %p222, %s223, %s224
      %p228 = pneg %p222
      %p229 = scmp.eq.s32.totalorder %s19, 3
      %p230 = por %p228, %p229
      %p231 = scmp.ne.s32.totalorder %s223, %s226
      %p232 = scmp.eq.s32.totalorder %s19, 0
      %p233 = por %p231, %p232
      %p234 = scmp.ne.s32.totalorder %s223, %s226
      %p235 = scmp.eq.s32.totalorder %s24, 3
      %p236 = por %p234, %p235
      %p237 = scmp.ne.s32.totalorder %s226, %s227
      %p238 = scmp.eq.s32.totalorder %s24, 0
      %p239 = por %p237, %p238
      %p240 = scmp.ne.s32.totalorder %s226, %s227
      %p241 = scmp.eq.s32.totalorder %s25, 3
      %p242 = por %p240, %p241
      %p244 = scmp.ne.s32.totalorder %s227, %s243
      %p245 = scmp.eq.s32.totalorder %s25, 0
      %p246 = por %p244, %p245
      %p247 = scmp.le.s32.totalorder 1, %s19
      %p248 = scmp.lt.s32.totalorder %s19, 5
      %p249 = pnand %p247, %p248
      %p250 = pneg %p249
      // Predicated region
      $region9: #{tpu_custom_call.1} parent=5 // pred_check
        _
      $region10: #{tpu_custom_call.1} parent=5 // pred_check_branch
        %252 = sbr.rel (%p249) target = $region12
      $region11: #{tpu_custom_call.1} parent=5 // pred_region
        %s253 = ssub.s32 %s19, 1
        // Predicated region
        $region13: #{tpu_custom_call.1} parent=11 // pred_check
          %p254 = pneg %p66
        $region14: #{tpu_custom_call.1} parent=11 // pred_check_branch
          %256 = sbr.rel (%p254) target = $region16
        $region15: #{tpu_custom_call.1} parent=11 // pred_region
          _
        $region16: #{tpu_custom_call.1} parent=11 // pred_fallthru
          _
        // Predicated region
        $region17: #{tpu_custom_call.1} parent=11 // pred_check
          %p257 = pneg %p87
        $region18: #{tpu_custom_call.1} parent=11 // pred_check_branch
          %259 = sbr.rel (%p257) target = $region20
        $region19: #{tpu_custom_call.1} parent=11 // pred_region
          _
        $region20: #{tpu_custom_call.1} parent=11 // pred_fallthru
          _
        // Predicated region
        $region21: #{tpu_custom_call.1} parent=11 // pred_check
          %p260 = pneg %p108
        $region22: #{tpu_custom_call.1} parent=11 // pred_check_branch
          %262 = sbr.rel (%p260) target = $region24
        $region23: #{tpu_custom_call.1} parent=11 // pred_region
          _
        $region24: #{tpu_custom_call.1} parent=11 // pred_fallthru
          _
        // Predicated region
        $region25: #{tpu_custom_call.1} parent=11 // pred_check
          %p263 = pneg %p129
        $region26: #{tpu_custom_call.1} parent=11 // pred_check_branch
          %265 = sbr.rel (%p263) target = $region28
        $region27: #{tpu_custom_call.1} parent=11 // pred_region
          _
        $region28: #{tpu_custom_call.1} parent=11 // pred_fallthru
          _
        // Predicated region
        $region29: #{tpu_custom_call.1} parent=11 // pred_check
          %p266 = pneg %p150
        $region30: #{tpu_custom_call.1} parent=11 // pred_check_branch
          %268 = sbr.rel (%p266) target = $region32
        $region31: #{tpu_custom_call.1} parent=11 // pred_region
          %s270 = ssub.s32 1024, 1024
          %271 = vsyncadd [#allocation5], %s270
          %s272 = sshll.u32 [#allocation4], 4
          %s273 = int_to_ptr.vmem [resolvable:$true] %s272
          %278 = dma.hbm_to_vmem [thread:$0]  %s5, 1024, %s273, [#allocation5], 64, 64, 4
        $region32: #{tpu_custom_call.1} parent=11 // pred_fallthru
          _
        // Predicated region
        $region33: #{tpu_custom_call.1} parent=11 // pred_check
          %p279 = pneg %p171
        $region34: #{tpu_custom_call.1} parent=11 // pred_check_branch
          %281 = sbr.rel (%p279) target = $region36
        $region35: #{tpu_custom_call.1} parent=11 // pred_region
          _
        $region36: #{tpu_custom_call.1} parent=11 // pred_fallthru
          _
        // Predicated region
        $region37: #{tpu_custom_call.1} parent=11 // pred_check
          %p282 = pneg %p192
        $region38: #{tpu_custom_call.1} parent=11 // pred_check_branch
          %284 = sbr.rel (%p282) target = $region40
        $region39: #{tpu_custom_call.1} parent=11 // pred_region
          _
        $region40: #{tpu_custom_call.1} parent=11 // pred_fallthru
          _
        // Predicated region
        $region41: #{tpu_custom_call.1} parent=11 // pred_check
          %p285 = pneg %p213
        $region42: #{tpu_custom_call.1} parent=11 // pred_check_branch
          %287 = sbr.rel (%p285) target = $region44
        $region43: #{tpu_custom_call.1} parent=11 // pred_region
          _
        $region44: #{tpu_custom_call.1} parent=11 // pred_fallthru
          _
      $region12: #{tpu_custom_call.1} parent=5 // pred_fallthru
        _
      %p288 = scmp.lt.s32.totalorder %s19, 4
      // Predicated region
      $region45: #{tpu_custom_call.1} parent=5 // pred_check
        %p289 = pneg %p288
      $region46: #{tpu_custom_call.1} parent=5 // pred_check_branch
        %291 = sbr.rel (%p289) target = $region48
      $region47: #{tpu_custom_call.1} parent=5 // pred_region
        // Predicated region
        $region49: #{tpu_custom_call.1} parent=47 // pred_check
          %p292 = pneg %p39
        $region50: #{tpu_custom_call.1} parent=47 // pred_check_branch
          %294 = sbr.rel (%p292) target = $region52
        $region51: #{tpu_custom_call.1} parent=47 // pred_region
          %s295 = sand.u32 %s29, 1
          %s296 = scalar_lea.sflag [#allocation3], %s295
          %s297 = sand.u32 %s29, 1
          %s298 = smul.addr %s297, 16
          %s299 = scalar_lea.vmem [#allocation2], %s298
          %s300 = smul.u32 2, %s19
          %s301 = ssub.s32 7, %s300
          %p302 = scmp.lt.s32.totalorder %s301, 2
          %s303 = scalar_select %p302, %s301, 2
          %s304 = smul.u32 128, %s303
          %s306 = ssub.s32 256, %s304
          %307 = vsyncadd %s296, %s306
          %p308 = scmp.ne.s32.totalorder 0, %s304
          %s309 = smul.addr %s300, 128
          %s310 = scalar_lea.hbm %s0, %s309
          %s311 = smul.u32 8, %s303
          %s312 = sshll.u32 %s299, 4
          %s313 = int_to_ptr.vmem [resolvable:$true] %s312
          %s314 = sshll.u32 %s311, 4
          %318 = dma.hbm_to_vmem [thread:$0]  (%p308), %s310, %s314, %s313, %s296, 128, 128, 8
        $region52: #{tpu_custom_call.1} parent=47 // pred_fallthru
          _
      $region48: #{tpu_custom_call.1} parent=5 // pred_fallthru
        _
      %p319 = scmp.le.s32.totalorder 1, %s19
      %p320 = scmp.lt.s32.totalorder %s19, 5
      %p321 = pnand %p319, %p320
      %p322 = pneg %p321
      // Predicated region
      $region53: #{tpu_custom_call.1} parent=5 // pred_check
        _
      $region54: #{tpu_custom_call.1} parent=5 // pred_check_branch
        %324 = sbr.rel (%p321) target = $region56
      $region55: #{tpu_custom_call.1} parent=5 // pred_region
        %s325 = ssub.s32 %s19, 1
        %s326 = sand.u32 %s32, 1
        %s327 = scalar_lea.sflag [#allocation3], %s326
        %s328 = sand.u32 %s32, 1
        %s329 = smul.addr %s328, 16
        %s330 = scalar_lea.vmem [#allocation2], %s329
        // Predicated region
        $region57: #{tpu_custom_call.1} parent=55 // pred_check
          %p331 = pneg %p45
        $region58: #{tpu_custom_call.1} parent=55 // pred_check_branch
          %333 = sbr.rel (%p331) target = $region60
        $region59: #{tpu_custom_call.1} parent=55 // pred_region
          %334 = dma.done %s327, 256
        $region60: #{tpu_custom_call.1} parent=55 // pred_fallthru
          _
        // Predicated region
        $region61: #{tpu_custom_call.1} parent=55 // pred_check
          %p335 = pneg %p150
        $region62: #{tpu_custom_call.1} parent=55 // pred_check_branch
          %337 = sbr.rel (%p335) target = $region64
        $region63: #{tpu_custom_call.1} parent=55 // pred_region
          %338 = dma.done [#allocation5], 1024
        $region64: #{tpu_custom_call.1} parent=55 // pred_fallthru
          _
        %s339 = sand.u32 %s32, 1
        %s340 = scalar_lea.sflag [#allocation3], %s339
        %s341 = sand.u32 %s32, 1
        %s342 = smul.addr %s341, 16
        %s343 = scalar_lea.vmem [#allocation2], %s342
        %p344 = pneg %p45
        %p345 = pneg %p42
        %p346 = pneg %p66
        %p347 = pneg %p63
        %p348 = pneg %p87
        %p349 = pneg %p84
        %p350 = pneg %p108
        %p351 = pneg %p105
        %p352 = pneg %p129
        %p353 = pneg %p126
        %p354 = pneg %p150
        %p355 = pneg %p147
        %p356 = pneg %p171
        %p357 = pneg %p168
        %p358 = pneg %p192
        %p359 = pneg %p189
        %p360 = pneg %p213
        %p361 = pneg %p210
        %p362 = pneg %p239
        %p363 = pneg %p236
        %s364 = sand.u32 %s226, 1
        %s365 = sand.u32 %s226, 1
        %s366 = smul.addr %s365, 16
        %s367 = scalar_lea.vmem [#allocation6], %s366
        %s368 = smul.u32 2, %s24
        %s369 = ssub.s32 7, %s368
        %p370 = scmp.lt.s32.totalorder %s369, 2
        %s371 = scalar_select %p370, %s369, 2
        %s372 = smul.u32 128, %s371
        %s373 = smul.u32 2, %s24
        %s374 = ssub.s32 7, %s373
        %p375 = scmp.lt.s32.totalorder %s374, 2
        %s376 = scalar_select %p375, %s374, 2
        %s377 = smul.u32 128, %s376
        %v379 = vld [vmem:[%s330] sm:$0xff]
        %v380 = vld [vmem:[%s330 + $0x8] sm:$0xff]
        %v381 = vpack.c.bf16 %v380, %v379
        %v382 = vld [vmem:[%s1] sm:$0xf]
        %v383 = vld [vmem:[%s1 + $0x4] sm:$0xf]
        %v384 = vld [vmem:[%s1 + $0x8] sm:$0xf]
        %v385 = vld [vmem:[%s1 + $0xc] sm:$0xf]
        %v386 = vld [vmem:[%s1 + $0x10] sm:$0xf]
        %v387 = vld [vmem:[%s1 + $0x14] sm:$0xf]
        %v388 = vld [vmem:[%s1 + $0x18] sm:$0xf]
        %v389 = vld [vmem:[%s1 + $0x1c] sm:$0xf]
        %v390 = vld [vmem:[%s1 + $0x20] sm:$0xf]
        %v391 = vld [vmem:[%s1 + $0x24] sm:$0xf]
        %v392 = vld [vmem:[%s1 + $0x28] sm:$0xf]
        %v393 = vld [vmem:[%s1 + $0x2c] sm:$0xf]
        %v394 = vld [vmem:[%s1 + $0x30] sm:$0xf]
        %v395 = vld [vmem:[%s1 + $0x34] sm:$0xf]
        %v396 = vld [vmem:[%s1 + $0x38] sm:$0xf]
        %v397 = vld [vmem:[%s1 + $0x3c] sm:$0xf]
        %v398 = vld [vmem:[%s2] sm:$0x1]
        %v400 = vlaneseq
        %v401 = vshrl.u32 %v400, 7
        %v402 = vsub.s32 0, %v401
        %v403 = vrot.slane %v398, %v402
        %v421 = vunpack.c.l.b16 %v382
        %v422 = vunpack.c.l.b16 %v383
        %v423 = vunpack.c.l.b16 %v384
        %v424 = vunpack.c.l.b16 %v385
        %v425 = vunpack.c.l.b16 %v386
        %v426 = vunpack.c.l.b16 %v387
        %v427 = vunpack.c.l.b16 %v388
        %v428 = vunpack.c.l.b16 %v389
        %v429 = vunpack.c.l.b16 %v390
        %v430 = vunpack.c.l.b16 %v391
        %v431 = vunpack.c.l.b16 %v392
        %v432 = vunpack.c.l.b16 %v393
        %v433 = vunpack.c.l.b16 %v394
        %v434 = vunpack.c.l.b16 %v395
        %v435 = vunpack.c.l.b16 %v396
        %v436 = vunpack.c.l.b16 %v397
        %v437 = vpack.c.b16 %v422, %v421
        %v438 = vpack.c.b16 %v424, %v423
        %v439 = vpack.c.b16 %v426, %v425
        %v440 = vpack.c.b16 %v428, %v427
        %v441 = vpack.c.b16 %v430, %v429
        %v442 = vpack.c.b16 %v432, %v431
        %v443 = vpack.c.b16 %v434, %v433
        %v444 = vpack.c.b16 %v436, %v435
        %453 = vmatprep.subr.bf16.mxu0 0
        %454 = vmatpush1.bf16.msra.mxu0 %v437
        %455 = vmatprep.subr.bf16.mxu0 0
        %456 = vmatpush1.bf16.msra.mxu0 %v438
        %457 = vmatprep.subr.bf16.mxu0 0
        %458 = vmatpush1.bf16.msra.mxu0 %v439
        %459 = vmatprep.subr.bf16.mxu0 0
        %460 = vmatpush1.bf16.msra.mxu0 %v440
        %461 = vmatprep.subr.bf16.mxu0 0
        %462 = vmatpush1.bf16.msra.mxu0 %v441
        %463 = vmatprep.subr.bf16.mxu0 0
        %464 = vmatpush1.bf16.msra.mxu0 %v442
        %465 = vmatprep.subr.bf16.mxu0 0
        %466 = vmatpush1.bf16.msra.mxu0 %v443
        %467 = vmatprep.subr.bf16.mxu0 0
        %468 = vmatpush1.bf16.msra.mxu0 %v444
        %469 = vmatprep.subr.bf16.mxu0 0
        %470 = vmatpush1.bf16.msra.mxu0 0
        %471 = vmatprep.subr.bf16.mxu0 0
        %472 = vmatpush1.bf16.msra.mxu0 0
        %473 = vmatprep.subr.bf16.mxu0 0
        %474 = vmatpush1.bf16.msra.mxu0 0
        %475 = vmatprep.subr.bf16.mxu0 0
        %476 = vmatpush1.bf16.msra.mxu0 0
        %477 = vmatprep.subr.bf16.mxu0 0
        %478 = vmatpush1.bf16.msra.mxu0 0
        %479 = vmatprep.subr.bf16.mxu0 0
        %480 = vmatpush1.bf16.msra.mxu0 0
        %481 = vmatprep.subr.bf16.mxu0 0
        %482 = vmatpush1.bf16.msra.mxu0 0
        %483 = vmatprep.subr.bf16.mxu0 0
        %484 = vmatpush1.bf16.msra.mxu0 0
        %485 = vmatprep.mubr.bf16.mxu0 0
        %486 = vmatmul.mubr.bf16.gmra.mrb[0].mxu0 %v381
        %v487 = vpop.f32.mrb[0].mxu0
        %v488 = vadd.f32 %v403, %v487
        %v489 = vpop.f32.mrb[0].mxu0
        %v490 = vpop.f32.mrb[0].mxu0
        %v491 = vadd.f32 %v403, %v490
        %v492 = vpop.f32.mrb[0].mxu0
        %493 = vdwg.mxu0
        %v494 = vmax.f32 %v488, 0.0
        %v495 = vmax.f32 %v491, 0.0
        %v496 = vpack.c.bf16 %v495, %v494
        %v497 = vld [vmem:[%s3] sm:$0xf]
        %v498 = vld [vmem:[%s3 + $0x4] sm:$0xf]
        %v499 = vld [vmem:[%s3 + $0x8] sm:$0xf]
        %v500 = vld [vmem:[%s3 + $0xc] sm:$0xf]
        %v501 = vld [vmem:[%s3 + $0x10] sm:$0xf]
        %v502 = vld [vmem:[%s3 + $0x14] sm:$0xf]
        %v503 = vld [vmem:[%s3 + $0x18] sm:$0xf]
        %v504 = vld [vmem:[%s3 + $0x1c] sm:$0xf]
        %v505 = vld [vmem:[%s3 + $0x20] sm:$0xf]
        %v506 = vld [vmem:[%s3 + $0x24] sm:$0xf]
        %v507 = vld [vmem:[%s3 + $0x28] sm:$0xf]
        %v508 = vld [vmem:[%s3 + $0x2c] sm:$0xf]
        %v509 = vld [vmem:[%s3 + $0x30] sm:$0xf]
        %v510 = vld [vmem:[%s3 + $0x34] sm:$0xf]
        %v511 = vld [vmem:[%s3 + $0x38] sm:$0xf]
        %v512 = vld [vmem:[%s3 + $0x3c] sm:$0xf]
        %v513 = vld [vmem:[%s4] sm:$0x1]
        %v515 = vlaneseq
        %v516 = vshrl.u32 %v515, 7
        %v517 = vsub.s32 0, %v516
        %v518 = vrot.slane %v513, %v517
        %v536 = vunpack.c.l.b16 %v497
        %v537 = vunpack.c.l.b16 %v498
        %v538 = vunpack.c.l.b16 %v499
        %v539 = vunpack.c.l.b16 %v500
        %v540 = vunpack.c.l.b16 %v501
        %v541 = vunpack.c.l.b16 %v502
        %v542 = vunpack.c.l.b16 %v503
        %v543 = vunpack.c.l.b16 %v504
        %v544 = vunpack.c.l.b16 %v505
        %v545 = vunpack.c.l.b16 %v506
        %v546 = vunpack.c.l.b16 %v507
        %v547 = vunpack.c.l.b16 %v508
        %v548 = vunpack.c.l.b16 %v509
        %v549 = vunpack.c.l.b16 %v510
        %v550 = vunpack.c.l.b16 %v511
        %v551 = vunpack.c.l.b16 %v512
        %v552 = vpack.c.b16 %v537, %v536
        %v553 = vpack.c.b16 %v539, %v538
        %v554 = vpack.c.b16 %v541, %v540
        %v555 = vpack.c.b16 %v543, %v542
        %v556 = vpack.c.b16 %v545, %v544
        %v557 = vpack.c.b16 %v547, %v546
        %v558 = vpack.c.b16 %v549, %v548
        %v559 = vpack.c.b16 %v551, %v550
        %568 = vmatprep.subr.bf16.mxu0 0
        %569 = vmatpush1.bf16.msra.mxu0 %v552
        %570 = vmatprep.subr.bf16.mxu0 0
        %571 = vmatpush1.bf16.msra.mxu0 %v553
        %572 = vmatprep.subr.bf16.mxu0 0
        %573 = vmatpush1.bf16.msra.mxu0 %v554
        %574 = vmatprep.subr.bf16.mxu0 0
        %575 = vmatpush1.bf16.msra.mxu0 %v555
        %576 = vmatprep.subr.bf16.mxu0 0
        %577 = vmatpush1.bf16.msra.mxu0 %v556
        %578 = vmatprep.subr.bf16.mxu0 0
        %579 = vmatpush1.bf16.msra.mxu0 %v557
        %580 = vmatprep.subr.bf16.mxu0 0
        %581 = vmatpush1.bf16.msra.mxu0 %v558
        %582 = vmatprep.subr.bf16.mxu0 0
        %583 = vmatpush1.bf16.msra.mxu0 %v559
        %584 = vmatprep.subr.bf16.mxu0 0
        %585 = vmatpush1.bf16.msra.mxu0 0
        %586 = vmatprep.subr.bf16.mxu0 0
        %587 = vmatpush1.bf16.msra.mxu0 0
        %588 = vmatprep.subr.bf16.mxu0 0
        %589 = vmatpush1.bf16.msra.mxu0 0
        %590 = vmatprep.subr.bf16.mxu0 0
        %591 = vmatpush1.bf16.msra.mxu0 0
        %592 = vmatprep.subr.bf16.mxu0 0
        %593 = vmatpush1.bf16.msra.mxu0 0
        %594 = vmatprep.subr.bf16.mxu0 0
        %595 = vmatpush1.bf16.msra.mxu0 0
        %596 = vmatprep.subr.bf16.mxu0 0
        %597 = vmatpush1.bf16.msra.mxu0 0
        %598 = vmatprep.subr.bf16.mxu0 0
        %599 = vmatpush1.bf16.msra.mxu0 0
        %600 = vmatprep.mubr.bf16.mxu0 0
        %601 = vmatmul.mubr.bf16.gmra.mrb[0].mxu0 %v496
        %v602 = vpop.f32.mrb[0].mxu0
        %v603 = vadd.f32 %v518, %v602
        %v604 = vpop.f32.mrb[0].mxu0
        %v605 = vpop.f32.mrb[0].mxu0
        %v606 = vadd.f32 %v518, %v605
        %v607 = vpop.f32.mrb[0].mxu0
        %608 = vdwg.mxu0
        %v609 = vmax.f32 %v603, 0.0
        %v610 = vmax.f32 %v606, 0.0
        %v611 = vpack.c.bf16 %v610, %v609
        %v612 = vld [vmem:[#allocation4] sm:$0xf]
        %v613 = vld [vmem:[#allocation4 + $0x4] sm:$0xf]
        %v614 = vld [vmem:[#allocation4 + $0x8] sm:$0xf]
        %v615 = vld [vmem:[#allocation4 + $0xc] sm:$0xf]
        %v616 = vld [vmem:[#allocation4 + $0x10] sm:$0xf]
        %v617 = vld [vmem:[#allocation4 + $0x14] sm:$0xf]
        %v618 = vld [vmem:[#allocation4 + $0x18] sm:$0xf]
        %v619 = vld [vmem:[#allocation4 + $0x1c] sm:$0xf]
        %v620 = vld [vmem:[#allocation4 + $0x20] sm:$0xf]
        %v621 = vld [vmem:[#allocation4 + $0x24] sm:$0xf]
        %v622 = vld [vmem:[#allocation4 + $0x28] sm:$0xf]
        %v623 = vld [vmem:[#allocation4 + $0x2c] sm:$0xf]
        %v624 = vld [vmem:[#allocation4 + $0x30] sm:$0xf]
        %v625 = vld [vmem:[#allocation4 + $0x34] sm:$0xf]
        %v626 = vld [vmem:[#allocation4 + $0x38] sm:$0xf]
        %v627 = vld [vmem:[#allocation4 + $0x3c] sm:$0xf]
        %v628 = vld [vmem:[%s6] sm:$0x1]
        %v630 = vlaneseq
        %v631 = vshrl.u32 %v630, 7
        %v632 = vsub.s32 0, %v631
        %v633 = vrot.slane %v628, %v632
        %v651 = vunpack.c.l.b16 %v612
        %v652 = vunpack.c.l.b16 %v613
        %v653 = vunpack.c.l.b16 %v614
        %v654 = vunpack.c.l.b16 %v615
        %v655 = vunpack.c.l.b16 %v616
        %v656 = vunpack.c.l.b16 %v617
        %v657 = vunpack.c.l.b16 %v618
        %v658 = vunpack.c.l.b16 %v619
        %v659 = vunpack.c.l.b16 %v620
        %v660 = vunpack.c.l.b16 %v621
        %v661 = vunpack.c.l.b16 %v622
        %v662 = vunpack.c.l.b16 %v623
        %v663 = vunpack.c.l.b16 %v624
        %v664 = vunpack.c.l.b16 %v625
        %v665 = vunpack.c.l.b16 %v626
        %v666 = vunpack.c.l.b16 %v627
        %v667 = vpack.c.b16 %v652, %v651
        %v668 = vpack.c.b16 %v654, %v653
        %v669 = vpack.c.b16 %v656, %v655
        %v670 = vpack.c.b16 %v658, %v657
        %v671 = vpack.c.b16 %v660, %v659
        %v672 = vpack.c.b16 %v662, %v661
        %v673 = vpack.c.b16 %v664, %v663
        %v674 = vpack.c.b16 %v666, %v665
        %683 = vmatprep.subr.bf16.mxu0 0
        %684 = vmatpush1.bf16.msra.mxu0 %v667
        %685 = vmatprep.subr.bf16.mxu0 0
        %686 = vmatpush1.bf16.msra.mxu0 %v668
        %687 = vmatprep.subr.bf16.mxu0 0
        %688 = vmatpush1.bf16.msra.mxu0 %v669
        %689 = vmatprep.subr.bf16.mxu0 0
        %690 = vmatpush1.bf16.msra.mxu0 %v670
        %691 = vmatprep.subr.bf16.mxu0 0
        %692 = vmatpush1.bf16.msra.mxu0 %v671
        %693 = vmatprep.subr.bf16.mxu0 0
        %694 = vmatpush1.bf16.msra.mxu0 %v672
        %695 = vmatprep.subr.bf16.mxu0 0
        %696 = vmatpush1.bf16.msra.mxu0 %v673
        %697 = vmatprep.subr.bf16.mxu0 0
        %698 = vmatpush1.bf16.msra.mxu0 %v674
        %699 = vmatprep.subr.bf16.mxu0 0
        %700 = vmatpush1.bf16.msra.mxu0 0
        %701 = vmatprep.subr.bf16.mxu0 0
        %702 = vmatpush1.bf16.msra.mxu0 0
        %703 = vmatprep.subr.bf16.mxu0 0
        %704 = vmatpush1.bf16.msra.mxu0 0
        %705 = vmatprep.subr.bf16.mxu0 0
        %706 = vmatpush1.bf16.msra.mxu0 0
        %707 = vmatprep.subr.bf16.mxu0 0
        %708 = vmatpush1.bf16.msra.mxu0 0
        %709 = vmatprep.subr.bf16.mxu0 0
        %710 = vmatpush1.bf16.msra.mxu0 0
        %711 = vmatprep.subr.bf16.mxu0 0
        %712 = vmatpush1.bf16.msra.mxu0 0
        %713 = vmatprep.subr.bf16.mxu0 0
        %714 = vmatpush1.bf16.msra.mxu0 0
        %715 = vmatprep.mubr.bf16.mxu0 0
        %716 = vmatmul.mubr.bf16.gmra.mrb[0].mxu0 %v611
        %v717 = vpop.f32.mrb[0].mxu0
        %v718 = vadd.f32 %v633, %v717
        %v719 = vpop.f32.mrb[0].mxu0
        %v720 = vpop.f32.mrb[0].mxu0
        %v721 = vadd.f32 %v633, %v720
        %v722 = vpop.f32.mrb[0].mxu0
        %723 = vdwg.mxu0
        %v724 = vmax.f32 %v718, 0.0
        %v725 = vmax.f32 %v721, 0.0
        %v726 = vld [vmem:[%s7] sm:$0xff]
        %v727 = vld [vmem:[%s7 + $0x8] sm:$0xff]
        %v728 = vld [vmem:[%s7 + $0x10] sm:$0xff]
        %v729 = vld [vmem:[%s7 + $0x18] sm:$0xff]
        %v730 = vld [vmem:[%s7 + $0x20] sm:$0xff]
        %v731 = vld [vmem:[%s7 + $0x28] sm:$0xff]
        %v732 = vld [vmem:[%s7 + $0x30] sm:$0xff]
        %v733 = vld [vmem:[%s7 + $0x38] sm:$0xff]
        %v734 = vld [vmem:[%s7 + $0x40] sm:$0xff]
        %v735 = vld [vmem:[%s7 + $0x48] sm:$0xff]
        %v736 = vld [vmem:[%s7 + $0x50] sm:$0xff]
        %v737 = vld [vmem:[%s7 + $0x58] sm:$0xff]
        %v738 = vld [vmem:[%s7 + $0x60] sm:$0xff]
        %v739 = vld [vmem:[%s7 + $0x68] sm:$0xff]
        %v740 = vld [vmem:[%s7 + $0x70] sm:$0xff]
        %v741 = vld [vmem:[%s7 + $0x78] sm:$0xff]
        %v742 = vld [vmem:[%s8] sm:$0x1]
        %v744 = vlaneseq
        %v745 = vshrl.u32 %v744, 7
        %v746 = vsub.s32 0, %v745
        %v747 = vrot.slane %v742, %v746
        %749 = vmatprep.subr.mxu0 0.0
        %750 = vmatpush1.msra.mxu0 %v726
        %751 = vmatprep.subr.mxu0 0.0
        %752 = vmatpush1.msra.mxu0 %v727
        %753 = vmatprep.subr.mxu0 0.0
        %754 = vmatpush1.msra.mxu0 %v728
        %755 = vmatprep.subr.mxu0 0.0
        %756 = vmatpush1.msra.mxu0 %v729
        %757 = vmatprep.subr.mxu0 0.0
        %758 = vmatpush1.msra.mxu0 %v730
        %759 = vmatprep.subr.mxu0 0.0
        %760 = vmatpush1.msra.mxu0 %v731
        %761 = vmatprep.subr.mxu0 0.0
        %762 = vmatpush1.msra.mxu0 %v732
        %763 = vmatprep.subr.mxu0 0.0
        %764 = vmatpush1.msra.mxu0 %v733
        %765 = vmatprep.subr.mxu0 0.0
        %766 = vmatpush1.msra.mxu0 %v734
        %767 = vmatprep.subr.mxu0 0.0
        %768 = vmatpush1.msra.mxu0 %v735
        %769 = vmatprep.subr.mxu0 0.0
        %770 = vmatpush1.msra.mxu0 %v736
        %771 = vmatprep.subr.mxu0 0.0
        %772 = vmatpush1.msra.mxu0 %v737
        %773 = vmatprep.subr.mxu0 0.0
        %774 = vmatpush1.msra.mxu0 %v738
        %775 = vmatprep.subr.mxu0 0.0
        %776 = vmatpush1.msra.mxu0 %v739
        %777 = vmatprep.subr.mxu0 0.0
        %778 = vmatpush1.msra.mxu0 %v740
        %779 = vmatprep.subr.mxu0 0.0
        %780 = vmatpush1.msra.mxu0 %v741
        %781 = vmatprep.subr.mxu0 0.0
        %782 = vmatpush1.msra.mxu0 0.0
        %783 = vmatprep.subr.mxu0 0.0
        %784 = vmatpush1.msra.mxu0 0.0
        %785 = vmatprep.subr.mxu0 0.0
        %786 = vmatpush1.msra.mxu0 0.0
        %787 = vmatprep.subr.mxu0 0.0
        %788 = vmatpush1.msra.mxu0 0.0
        %789 = vmatprep.subr.mxu0 0.0
        %790 = vmatpush1.msra.mxu0 0.0
        %791 = vmatprep.subr.mxu0 0.0
        %792 = vmatpush1.msra.mxu0 0.0
        %793 = vmatprep.subr.mxu0 0.0
        %794 = vmatpush1.msra.mxu0 0.0
        %795 = vmatprep.subr.mxu0 0.0
        %796 = vmatpush1.msra.mxu0 0.0
        %797 = vmatprep.subr.mxu0 0.0
        %798 = vmatpush1.msra.mxu0 0.0
        %799 = vmatprep.subr.mxu0 0.0
        %800 = vmatpush1.msra.mxu0 0.0
        %801 = vmatprep.subr.mxu0 0.0
        %802 = vmatpush1.msra.mxu0 0.0
        %803 = vmatprep.subr.mxu0 0.0
        %804 = vmatpush1.msra.mxu0 0.0
        %805 = vmatprep.subr.mxu0 0.0
        %806 = vmatpush1.msra.mxu0 0.0
        %807 = vmatprep.subr.mxu0 0.0
        %808 = vmatpush1.msra.mxu0 0.0
        %809 = vmatprep.subr.mxu0 0.0
        %810 = vmatpush1.msra.mxu0 0.0
        %811 = vmatprep.subr.mxu0 0.0
        %812 = vmatpush1.msra.mxu0 0.0
        %813 = vmatprep.mubr.f32.mxu0 0.0
        %814 = vmatmul.mubr.f32.gmra.mrb[0].mxu0 %v724
        %v815 = vpop.f32.mrb[0].mxu0
        %v816 = vadd.f32 %v747, %v815
        %v817 = vpop.f32.mrb[0].mxu0
        %818 = vmatprep.mubr.f32.mxu0 0.0
        %819 = vmatmul.mubr.f32.gmra.mrb[0].mxu0 %v725
        %v820 = vpop.f32.mrb[0].mxu0
        %v821 = vadd.f32 %v747, %v820
        %v822 = vpop.f32.mrb[0].mxu0
        %823 = vdwg.mxu0
        %vm824 = vcmask 31744
        %825 = vst.msk [vmem:[%s367] sm:$0xff] %vm824, %v816
        %826 = vst.msk [vmem:[%s367 + $0x8] sm:$0xff] %vm824, %v821
        %s827 = sand.u32 %s226, 1
        %s828 = sand.u32 %s226, 1
        %s829 = smul.addr %s828, 16
        %s830 = scalar_lea.vmem [#allocation6], %s829
        // Predicated region
        $region65: #{tpu_custom_call.1} parent=55 // pred_check
          %p831 = pneg %p236
        $region66: #{tpu_custom_call.1} parent=55 // pred_check_branch
          %833 = sbr.rel (%p831) target = $region68
        $region67: #{tpu_custom_call.1} parent=55 // pred_region
          %s834 = smul.u32 2, %s24
          %s835 = ssub.s32 7, %s834
          %p836 = scmp.lt.s32.totalorder %s835, 2
          %s837 = scalar_select %p836, %s835, 2
          %s838 = smul.u32 128, %s837
          %p839 = scmp.ne.s32.totalorder 0, %s838
          %s840 = smul.addr %s834, 8
          %s841 = scalar_lea.vmem %s9, %s840
          // Predicated region
          $region69: #{tpu_custom_call.1} parent=67 // pred_check
            %p842 = pneg %p839
          $region70: #{tpu_custom_call.1} parent=67 // pred_check_branch
            %844 = sbr.rel (%p842) target = $region72
          $region71: #{tpu_custom_call.1} parent=67 // pred_region
            // Predicated region
            $region73: #{tpu_custom_call.1} parent=71 // pred_check
              _
            $region74: #{tpu_custom_call.1} parent=71 // pred_check_branch
              %846 = sbr.rel (0) target = $region76
            $region75: #{tpu_custom_call.1} parent=71 // pred_region
              // Predicated region
              $region95: #{tpu_custom_call.1} parent=75 // pred_check
                _
              $region96: #{tpu_custom_call.1} parent=75 // pred_check_branch
                %897 = sbr.rel (0) target = $region98
              $region97: #{tpu_custom_call.1} parent=75 // pred_region
                %s898 = sshrl.u32 %s837, 1
                // While loop
                $region99: #{tpu_custom_call.1} parent=97 // loop_pre_header
                  _
                $region100: #{tpu_custom_call.1} parent=97 // loop_header
                  %s900 = sphi 0, %s902
                  %p901 = scmp.ge.s32.totalorder %s900, %s898
                  %s905 = sphi 0, %s914
                  %s906 = sphi %s830, %s917
                  %s907 = sphi %s841, %s918
                $region101: #{tpu_custom_call.1} parent=97 // loop_header_branch
                  %904 = sbr.rel (%p901) target = $region105
                $region102: #{tpu_custom_call.1} parent=97 // loop_body
                  %v908 = vld [vmem:[%s906] sm:$0xff]
                  %909 = vst [vmem:[%s907] sm:$0xff] %v908
                  %v910 = vld [vmem:[%s906 + $0x8] sm:$0xff]
                  %911 = vst [vmem:[%s907 + $0x8] sm:$0xff] %v910
                  %s912 = sadd.s32 1, %s905
                  %p913 = scmp.ge.s32.totalorder %s912, %s898
                  %s914 = scalar_select %p913, 0, %s912
                  %s915 = smul.u32 %s914, 16
                  %s916 = smul.u32 %s914, 16
                  %s917 = scalar_lea.vmem %s830, %s915 [#allocation6]
                  %s918 = scalar_lea.vmem %s841, %s916
                $region103: #{tpu_custom_call.1} parent=97 // loop_footer
                  %s902 = sadd.s32 %s900, 1
                $region104: #{tpu_custom_call.1} parent=97 // loop_footer_branch
                  %899 = sbr.rel target = $region100
                $region105: #{tpu_custom_call.1} parent=97 // loop_exit
                  _
                %s919 = sshrl.u32 %s837, 1
                %s920 = sand.u32 %s837, 1
                %s921 = smul.u32 %s919, 2
                %s922 = smul.u32 8, %s921
                %s923 = scalar_lea.vmem %s830, %s922 [#allocation6]
                %s924 = smul.u32 8, %s921
                %s925 = scalar_lea.vmem %s841, %s924
                // While loop
                $region106: #{tpu_custom_call.1} parent=97 // loop_pre_header
                  _
                $region107: #{tpu_custom_call.1} parent=97 // loop_header
                  %s927 = sphi 0, %s929
                  %p928 = scmp.ge.s32.totalorder %s927, %s920
                  %s932 = sphi 0, %s939
                  %s933 = sphi %s923, %s942
                  %s934 = sphi %s925, %s943
                $region108: #{tpu_custom_call.1} parent=97 // loop_header_branch
                  %931 = sbr.rel (%p928) target = $region112
                $region109: #{tpu_custom_call.1} parent=97 // loop_body
                  %v935 = vld [vmem:[%s933] sm:$0xff]
                  %936 = vst [vmem:[%s934] sm:$0xff] %v935
                  %s937 = sadd.s32 1, %s932
                  %p938 = scmp.ge.s32.totalorder %s937, %s920
                  %s939 = scalar_select %p938, 0, %s937
                  %s940 = smul.u32 %s939, 8
                  %s941 = smul.u32 %s939, 8
                  %s942 = scalar_lea.vmem %s923, %s940 [#allocation6]
                  %s943 = scalar_lea.vmem %s925, %s941
                $region110: #{tpu_custom_call.1} parent=97 // loop_footer
                  %s929 = sadd.s32 %s927, 1
                $region111: #{tpu_custom_call.1} parent=97 // loop_footer_branch
                  %926 = sbr.rel target = $region107
                $region112: #{tpu_custom_call.1} parent=97 // loop_exit
                  _
              $region98: #{tpu_custom_call.1} parent=75 // pred_fallthru
                _
              // Predicated region
              $region113: #{tpu_custom_call.1} parent=75 // pred_check
                _
              $region114: #{tpu_custom_call.1} parent=75 // pred_check_branch
                %945 = sbr.rel target = $region116
              $region115: #{tpu_custom_call.1} parent=75 // pred_region
                _
              $region116: #{tpu_custom_call.1} parent=75 // pred_fallthru
                _
            $region76: #{tpu_custom_call.1} parent=71 // pred_fallthru
              _
            // Predicated region
            $region77: #{tpu_custom_call.1} parent=71 // pred_check
              _
            $region78: #{tpu_custom_call.1} parent=71 // pred_check_branch
              %848 = sbr.rel target = $region80
            $region79: #{tpu_custom_call.1} parent=71 // pred_region
              %s850 = sshrl.u32 %s837, 1
              // While loop
              $region81: #{tpu_custom_call.1} parent=79 // loop_pre_header
                _
              $region82: #{tpu_custom_call.1} parent=79 // loop_header
                %s852 = sphi 0, %s854
                %p853 = scmp.ge.s32.totalorder %s852, %s850
                %s857 = sphi 0, %s866
                %s858 = sphi %s830, %s869
                %s859 = sphi %s841, %s870
              $region83: #{tpu_custom_call.1} parent=79 // loop_header_branch
                %856 = sbr.rel (%p853) target = $region87
              $region84: #{tpu_custom_call.1} parent=79 // loop_body
                %v860 = vld [vmem:[%s858] sm:$0xff]
                %861 = vst [vmem:[%s859] sm:$0xff] %v860
                %v862 = vld [vmem:[%s858 + $0x8] sm:$0xff]
                %863 = vst [vmem:[%s859 + $0x8] sm:$0xff] %v862
                %s864 = sadd.s32 1, %s857
                %p865 = scmp.ge.s32.totalorder %s864, %s850
                %s866 = scalar_select %p865, 0, %s864
                %s867 = smul.u32 %s866, 16
                %s868 = smul.u32 %s866, 16
                %s869 = scalar_lea.vmem %s830, %s867 [#allocation6]
                %s870 = scalar_lea.vmem %s841, %s868
              $region85: #{tpu_custom_call.1} parent=79 // loop_footer
                %s854 = sadd.s32 %s852, 1
              $region86: #{tpu_custom_call.1} parent=79 // loop_footer_branch
                %851 = sbr.rel target = $region82
              $region87: #{tpu_custom_call.1} parent=79 // loop_exit
                _
              %s871 = sshrl.u32 %s837, 1
              %s872 = sand.u32 %s837, 1
              %s873 = smul.u32 %s871, 2
              %s874 = smul.u32 8, %s873
              %s875 = scalar_lea.vmem %s830, %s874 [#allocation6]
              %s876 = smul.u32 8, %s873
              %s877 = scalar_lea.vmem %s841, %s876
              // While loop
              $region88: #{tpu_custom_call.1} parent=79 // loop_pre_header
                _
              $region89: #{tpu_custom_call.1} parent=79 // loop_header
                %s879 = sphi 0, %s881
                %p880 = scmp.ge.s32.totalorder %s879, %s872
                %s884 = sphi 0, %s891
                %s885 = sphi %s875, %s894
                %s886 = sphi %s877, %s895
              $region90: #{tpu_custom_call.1} parent=79 // loop_header_branch
                %883 = sbr.rel (%p880) target = $region94
              $region91: #{tpu_custom_call.1} parent=79 // loop_body
                %v887 = vld [vmem:[%s885] sm:$0xff]
                %888 = vst [vmem:[%s886] sm:$0xff] %v887
                %s889 = sadd.s32 1, %s884
                %p890 = scmp.ge.s32.totalorder %s889, %s872
                %s891 = scalar_select %p890, 0, %s889
                %s892 = smul.u32 %s891, 8
                %s893 = smul.u32 %s891, 8
                %s894 = scalar_lea.vmem %s875, %s892 [#allocation6]
                %s895 = scalar_lea.vmem %s877, %s893
              $region92: #{tpu_custom_call.1} parent=79 // loop_footer
                %s881 = sadd.s32 %s879, 1
              $region93: #{tpu_custom_call.1} parent=79 // loop_footer_branch
                %878 = sbr.rel target = $region89
              $region94: #{tpu_custom_call.1} parent=79 // loop_exit
                _
            $region80: #{tpu_custom_call.1} parent=71 // pred_fallthru
              _
          $region72: #{tpu_custom_call.1} parent=67 // pred_fallthru
            _
          %946 = vnop
        $region68: #{tpu_custom_call.1} parent=55 // pred_fallthru
          _
      $region56: #{tpu_custom_call.1} parent=5 // pred_fallthru
        _
      %p947 = scmp.le.s32.totalorder 2, %s19
      // Predicated region
      $region117: #{tpu_custom_call.1} parent=5 // pred_check
        %p948 = pneg %p947
      $region118: #{tpu_custom_call.1} parent=5 // pred_check_branch
        %950 = sbr.rel (%p948) target = $region120
      $region119: #{tpu_custom_call.1} parent=5 // pred_region
        %s951 = ssub.s32 %s19, 2
        // Predicated region
        $region121: #{tpu_custom_call.1} parent=119 // pred_check
          %p952 = pneg %p242
        $region122: #{tpu_custom_call.1} parent=119 // pred_check_branch
          %954 = sbr.rel (%p952) target = $region124
        $region123: #{tpu_custom_call.1} parent=119 // pred_region
          %s955 = sand.u32 %s227, 1
          %s956 = sand.u32 %s227, 1
          %s957 = smul.addr %s956, 16
          %s958 = scalar_lea.vmem [#allocation6], %s957
        $region124: #{tpu_custom_call.1} parent=119 // pred_fallthru
          _
      $region120: #{tpu_custom_call.1} parent=5 // pred_fallthru
        _
    $region6: #{tpu_custom_call.1} parent=1 // loop_footer
      %s23 = sadd.s32 1, %s19
    $region7: #{tpu_custom_call.1} parent=1 // loop_footer_branch
      %18 = sbr.rel target = $region3
    $region8: #{tpu_custom_call.1} parent=1 // loop_exit
      _
    %959 = vsyncpa [#allocation3], 1
    %s960 = scalar_lea.sflag [#allocation3], 1
    %961 = vsyncpa %s960, 1
    %962 = vsyncpa [#allocation5], 1

</llo_original>
